<compile_context>
chip_gen: v6e
topology: v6e:2x2x1
jax: 0.10.0
libtpu: 0.0.40
codegen_flags: <defaults>
</compile_context>

<pallas_src>
import jax
import jax.numpy as jnp
from jax.experimental import pallas as pl
from jax.experimental.pallas import tpu as pltpu


def _round_up(x, m):
    return (x + m - 1) // m * m


def _generation_vmem_limit():
    """~3/4 of physical VMEM per TensorCore (v5e/v6e 128 MiB, v7x 64 MiB)."""
    try:
        phys = pltpu.get_tpu_info().vmem_capacity_bytes
    except Exception:
        phys = 64 * 1024 * 1024            # conservative fallback (v7x per-TC)
    return (phys * 3) // 4


def _opl_kernel(x_ref, w_ref, b_ref, o_ref):
    """out tile = x_tile @ w_tile + bias  (single MXU matmul, f32 accumulate).

    x_ref: [TB, Kpad]   flattened augmented outer product (zero-padded K)
    w_ref: [Kpad, TO]   weight slab tile (VMEM-resident across batch tiles)
    b_ref: [1, TO]      f32 bias (zero-padded, lane-dense)
    o_ref: [TB, TO]     output tile (TO % 128 == 0)
    """
    acc = jnp.dot(x_ref[...], w_ref[...], preferred_element_type=jnp.float32)
    o_ref[...] = (acc + b_ref[...]).astype(o_ref.dtype)


def prepare_opl_params(weight, bias, in_features1, in_features2, *,
                       block_o=512, compute_dtype=None):
    """Parameter-load-time preprocessing (hoisted out of the per-call path)."""
    O, Kflat = weight.shape
    f1p, f2p = in_features1 + 1, in_features2 + 1
    assert Kflat == f1p * f2p
    if compute_dtype is not None:
        weight = weight.astype(compute_dtype)   # bf16 MXU operands, f32 accumulate

    Kpad = _round_up(Kflat, 8)       # sublane-aligned contraction dim (keeps slab small)
    Opad = _round_up(O, 128)         # lane-dense output

    # W[o, i*f2p + j]  ->  w_pad[k, o]; zero rows/cols for the K/O padding.
    w_pad = jnp.pad(weight.T, ((0, Kpad - Kflat), (0, Opad - O)))
    if bias is None:
        b_pad = jnp.zeros((1, Opad), jnp.float32)
    else:
        b_pad = jnp.pad(bias.astype(jnp.float32), (0, Opad - O)).reshape(1, Opad)

    # ---- output-feature tile: generation-aware slab budget (double-buffered).
    gen_limit = _generation_vmem_limit()
    w_item = jnp.dtype(w_pad.dtype).itemsize
    slab_budget = gen_limit // 3                         # 2x slab <= 2/3 of limit
    budget_to = max(128, slab_budget // max(1, 2 * Kpad * w_item))
    cap = min(block_o, budget_to, Opad)
    if Opad >= 256:
        cap = min(cap, Opad // 2)    # >= 2 o-tiles so v7x's 2-TC split lands on o
    cap = max(128, (cap // 128) * 128)
    cands = [t for t in range(128, cap + 1, 128) if Opad % t == 0]
    cands256 = [t for t in cands if t % 256 == 0]
    TO = max(cands256) if cands256 else max(cands)       # 256-aligned when possible

    return dict(w=w_pad, b=b_pad, O=O, Kflat=Kflat, Kpad=Kpad, Opad=Opad, TO=TO,
                f1p=f1p, f2p=f2p, gen_limit=gen_limit)


def outer_product_linear_prepared(in1, in2, params, *, block_b=256):
    B, F1 = in1.shape
    B2, F2 = in2.shape
    assert B == B2 and F1 + 1 == params["f1p"] and F2 + 1 == params["f2p"]
    Kflat, Kpad = params["Kflat"], params["Kpad"]
    Opad, TO, O = params["Opad"], params["TO"], params["O"]
    w_pad, b_pad = params["w"], params["b"]
    out_dtype = in1.dtype

    # ---- double_moments glue (tiny [B, Kflat] intermediate; review-sanctioned).
    x1 = jnp.concatenate([in1, jnp.ones((B, 1), in1.dtype)], axis=1)   # [B, F1+1]
    y1 = jnp.concatenate([in2, jnp.ones((B, 1), in2.dtype)], axis=1)   # [B, F2+1]
    op_flat = (x1[:, :, None] * y1[:, None, :]).reshape(B, Kflat)

    # ---- batch tiling: Bpad barely exceeds B (e.g. 300 -> 304, not 512).
    nb = pl.cdiv(B, block_b)
    TB = _round_up(pl.cdiv(B, nb), 8)
    Bpad = nb * TB

    lhs = jnp.pad(op_flat, ((0, Bpad - B), (0, Kpad - Kflat)))
    if lhs.dtype != w_pad.dtype:
        lhs = lhs.astype(w_pad.dtype)

    # ---- VMEM limit from the actual (double-buffered) resident set.
    itm = lambda a: jnp.dtype(a.dtype).itemsize
    resident = (2 * TB * Kpad * itm(lhs) + 2 * Kpad * TO * itm(w_pad)
                + 2 * TO * 4 + 2 * TB * TO * jnp.dtype(out_dtype).itemsize)
    vmem_limit = int(min(params["gen_limit"],
                         max(resident * 5 // 4 + (2 << 20), 16 << 20)))

    # o-tiles outer, batch inner: weight/bias blocks are constant across the
    # inner axis and stay VMEM-resident while activations/outputs stream.
    grid = (Opad // TO, Bpad // TB)

    cost = pl.CostEstimate(
        flops=2 * Bpad * Kpad * Opad,
        transcendentals=0,
        bytes_accessed=(Bpad * Kpad * itm(lhs) + Kpad * Opad * itm(w_pad)
                        + Opad * 4 + Bpad * Opad * jnp.dtype(out_dtype).itemsize))

    out = pl.pallas_call(
        _opl_kernel,
        out_shape=jax.ShapeDtypeStruct((Bpad, Opad), out_dtype),
        grid=grid,
        in_specs=[
            pl.BlockSpec((TB, Kpad), lambda o, i: (i, 0)),
            pl.BlockSpec((Kpad, TO), lambda o, i: (0, o)),
            pl.BlockSpec((1, TO), lambda o, i: (0, o)),
        ],
        out_specs=pl.BlockSpec((TB, TO), lambda o, i: (i, o)),
        compiler_params=pltpu.CompilerParams(
            dimension_semantics=("parallel", "parallel"),
            vmem_limit_bytes=vmem_limit,
        ),
        cost_estimate=cost,
    )(lhs, w_pad, b_pad)

    return out[:B, :O]


def outer_product_linear(in1, in2, weight, bias=None, *, block_b=256, block_o=512,
                         compute_dtype=None):
    """Convenience wrapper.  NOTE: this re-runs the weight preprocessing each
    call; in a real loop call prepare_opl_params once at parameter-load time
    (as done in __main__) and use outer_product_linear_prepared."""
    F1, F2 = in1.shape[1], in2.shape[1]
    params = prepare_opl_params(weight, bias, F1, F2, block_o=block_o,
                                compute_dtype=compute_dtype)
    return outer_product_linear_prepared(in1, in2, params, block_b=block_b)


def _reference(in1, in2, weight, bias):
    B = in1.shape[0]
    x1 = jnp.concatenate([in1, jnp.ones((B, 1), in1.dtype)], axis=1)
    y1 = jnp.concatenate([in2, jnp.ones((B, 1), in2.dtype)], axis=1)
    op = (x1[:, :, None] * y1[:, None, :]).reshape(B, -1)
    out = op @ weight.T
    if bias is not None:
        out = out + bias[None, :]
    return out


if __name__ == "__main__":
    key = jax.random.PRNGKey(0)

    def make_case(k, B, F1, F2, OUT):
        k1, k2, kw, kb = jax.random.split(k, 4)
        in1 = jax.random.normal(k1, (B, F1), dtype=jnp.float32)
        in2 = jax.random.normal(k2, (B, F2), dtype=jnp.float32)
        fan_in = (F1 + 1) * (F2 + 1)
        bound = 1.0 / (fan_in ** 0.5)
        weight = jax.random.uniform(kw, (OUT, fan_in), jnp.float32, -bound, bound)
        bias = jax.random.uniform(kb, (OUT,), jnp.float32, -bound, bound)
        return in1, in2, weight, bias

    ka, kb_, kc_ = jax.random.split(key, 3)

    # Case 1: small shapes consistent with the module (B=2, F1=4, F2=6, out=8).
    in1, in2, w, b = make_case(ka, 2, 4, 6, 8)
    params = prepare_opl_params(w, b, 4, 6)              # hoisted param prep
    out = jax.block_until_ready(outer_product_linear_prepared(in1, in2, params))
    ref = _reference(in1, in2, w, b)
    assert out.shape == ref.shape
    assert jnp.allclose(out, ref, atol=1e-4, rtol=1e-4), "case1 mismatch vs reference"

    # Case 2: batch tiling (grid (2,2)), tight Bpad (300->304), O padding (200->256).
    in1, in2, w, b = make_case(kb_, 300, 9, 5, 200)
    params = prepare_opl_params(w, b, 9, 5)
    out = jax.block_until_ready(outer_product_linear_prepared(in1, in2, params))
    ref = _reference(in1, in2, w, b)
    assert out.shape == ref.shape
    assert jnp.allclose(out, ref, atol=1e-3, rtol=1e-3), "case2 mismatch vs reference"

    # Case 3: 256-wide output tiles (v6e/v7x MXU) via the convenience wrapper.
    in1, in2, w, b = make_case(kc_, 700, 12, 12, 512)
    out = jax.block_until_ready(outer_product_linear(in1, in2, w, b))
    ref = _reference(in1, in2, w, b)
    assert out.shape == ref.shape
    assert jnp.allclose(out, ref, atol=2e-3, rtol=2e-3), "case3 mismatch vs reference"

    print("KERNEL_OK")
</pallas_src>

<mosaic_0001>
module attributes {stable_mosaic.version = 11 : i64} {
  func.func @_opl_kernel(%arg0: i32, %arg1: i32, %arg2: memref<8x40xf32, #tpu.memory_space<vmem>>, %arg3: memref<40x128xf32, #tpu.memory_space<vmem>>, %arg4: memref<1x128xf32, #tpu.memory_space<vmem>>, %arg5: memref<8x128xf32, #tpu.memory_space<vmem>>) attributes {dimension_semantics = [#tpu.dimension_semantics<parallel>, #tpu.dimension_semantics<parallel>], iteration_bounds = array<i64: 1, 1>, scalar_prefetch = 0 : i64, scratch_operands = 0 : i64, tpu.core_type = #tpu.core_type<tc>, window_params = [{transform_indices = @transform_0, window_bounds = array<i64: 8, 40>}, {transform_indices = @transform_1, window_bounds = array<i64: 40, 128>}, {transform_indices = @transform_2, window_bounds = array<i64: 1, 128>}, {transform_indices = @transform_3, window_bounds = array<i64: 8, 128>}]} {
    %c0 = arith.constant 0 : index
    %c0_0 = arith.constant 0 : index
    %0 = vector.load %arg2[%c0, %c0_0] : memref<8x40xf32, #tpu.memory_space<vmem>>, vector<8x40xf32>
    %c0_1 = arith.constant 0 : index
    %c0_2 = arith.constant 0 : index
    %1 = vector.load %arg3[%c0_1, %c0_2] : memref<40x128xf32, #tpu.memory_space<vmem>>, vector<40x128xf32>
    %cst = arith.constant dense<0.000000e+00> : vector<8x128xf32>
    %2 = tpu.matmul %0, %1, %cst {dimension_numbers = #tpu.dot_dimension_numbers<[1], [0], [0], [1], [0, 0, 1, 1], [], []>} : vector<8x40xf32>, vector<40x128xf32>, vector<8x128xf32> -> vector<8x128xf32>
    %c0_3 = arith.constant 0 : index
    %c0_4 = arith.constant 0 : index
    %3 = vector.load %arg4[%c0_3, %c0_4] : memref<1x128xf32, #tpu.memory_space<vmem>>, vector<1x128xf32>
    %4 = vector.broadcast %3 : vector<1x128xf32> to vector<8x128xf32>
    %5 = arith.addf %2, %4 : vector<8x128xf32>
    %c0_5 = arith.constant 0 : index
    %c0_6 = arith.constant 0 : index
    %6 = vector.load %arg5[%c0_5, %c0_6] : memref<8x128xf32, #tpu.memory_space<vmem>>, vector<8x128xf32>
    tpu.vector_store %arg5[%c0_5, %c0_6], %5 {strides = array<i32>} : memref<8x128xf32, #tpu.memory_space<vmem>>, vector<8x128xf32>,
    return
  }
  func.func @transform_0(%arg0: i32, %arg1: i32) -> (i32, i32) {
    %c0_i32 = arith.constant 0 : i32
    %c0_i32_0 = arith.constant 0 : i32
    return %arg1, %c0_i32 : i32, i32
  }
  func.func @transform_1(%arg0: i32, %arg1: i32) -> (i32, i32) {
    %c0_i32 = arith.constant 0 : i32
    %c0_i32_0 = arith.constant 0 : i32
    return %c0_i32, %arg0 : i32, i32
  }
  func.func @transform_2(%arg0: i32, %arg1: i32) -> (i32, i32) {
    %c0_i32 = arith.constant 0 : i32
    %c0_i32_0 = arith.constant 0 : i32
    return %c0_i32, %arg0 : i32, i32
  }
  func.func @transform_3(%arg0: i32, %arg1: i32) -> (i32, i32) {
    %c0_i32 = arith.constant 0 : i32
    return %arg1, %arg0 : i32, i32
  }
}

</mosaic_0001>

<llo_original>
// kernel: tpu_custom_call.1
$region0: #{tpu_custom_call.1}
  #allocation0 [shape = 'u32[]', space=smem, size = 0x4, offset = 0x4, fixed_abs, tag = 'smem constant byte address 0x4 - core index']
  #allocation1 [shape = 'u32[144,128]{1,0:T(1,128)}', space=vmem, size = 0x12000, scoped, tag = 'internal scratch']
  %s0 = inlined_call_operand.hbm [shape: f32[8,40], index: 0, kind: input, shape index: {}]
  %s1 = inlined_call_operand.hbm [shape: f32[40,128], index: 1, kind: input, shape index: {}]
  %s2 = inlined_call_operand.vmem [shape: f32[1,128], index: 2, kind: input, shape index: {}]
  %s3 = inlined_call_operand.hbm [shape: f32[8,128], index: 3, kind: output, shape index: {}]
  %s4 = sld [smem:[#allocation0]]
  $region30: #{tpu_custom_call.1} parent=0
    _
  %s6 = ssub.s32 1, %s4
  %s7 = scalar_select 0, %s6, %s4
  $region1: #{tpu_custom_call.1} parent=0
    #allocation2 [shape = 'u8[4096]{0}', space=vmem, size = 0x1000, scoped, tag = 'input window, operand 0, single buffered']
    #allocation3 [shape = 's32[1]{0}', space=sflag, size = 0x4, scoped, tag = 'scoped memory for tpu_custom_call.1']
    #allocation4 [shape = 's32[1]{0}', space=sflag, size = 0x4, scoped, tag = 'scoped memory for tpu_custom_call.1']
    #allocation5 [shape = 'u8[20480]{0}', space=vmem, size = 0x5000, scoped, tag = 'input window, operand 1, single buffered']
    #allocation6 [shape = 's32[1]{0}', space=sflag, size = 0x4, scoped, tag = 'scoped memory for tpu_custom_call.1']
    #allocation7 [shape = 'u8[4096]{0}', space=vmem, size = 0x1000, scoped, tag = 'output window, operand 0, single buffered']
    %8 = vsyncpa [#allocation3], 0
    %9 = vsyncpa [#allocation6], 0
    %10 = vsyncpa [#allocation4], 0
    // Predicated region
    $region2: #{tpu_custom_call.1} parent=1 // pred_check
      _
    $region3: #{tpu_custom_call.1} parent=1 // pred_check_branch
      %12 = sbr.rel (0) target = $region5
    $region4: #{tpu_custom_call.1} parent=1 // pred_region
      %s14 = ssub.s32 128, 128
      %15 = vsyncadd [#allocation3], %s14
      %s17 = sshll.u32 [#allocation2], 4
      %s18 = int_to_ptr.vmem [resolvable:$true] %s17
      %20 = dma.hbm_to_vmem [thread:$0]  %s0, 128, %s18, [#allocation3]
    $region5: #{tpu_custom_call.1} parent=1 // pred_fallthru
      _
    // Predicated region
    $region6: #{tpu_custom_call.1} parent=1 // pred_check
      _
    $region7: #{tpu_custom_call.1} parent=1 // pred_check_branch
      %22 = sbr.rel (0) target = $region9
    $region8: #{tpu_custom_call.1} parent=1 // pred_region
      %s24 = ssub.s32 640, 640
      %25 = vsyncadd [#allocation6], %s24
      %s26 = sshll.u32 [#allocation5], 4
      %s27 = int_to_ptr.vmem [resolvable:$true] %s26
      %32 = dma.hbm_to_vmem [thread:$0]  %s1, 640, %s27, [#allocation6], 128, 128, 8
    $region9: #{tpu_custom_call.1} parent=1 // pred_fallthru
      _
    // Predicated region
    $region10: #{tpu_custom_call.1} parent=1 // pred_check
      _
    $region11: #{tpu_custom_call.1} parent=1 // pred_check_branch
      %34 = sbr.rel (0) target = $region13
    $region12: #{tpu_custom_call.1} parent=1 // pred_region
      _
    $region13: #{tpu_custom_call.1} parent=1 // pred_fallthru
      _
    // Predicated region
    $region14: #{tpu_custom_call.1} parent=1 // pred_check
      _
    $region15: #{tpu_custom_call.1} parent=1 // pred_check_branch
      %36 = sbr.rel (0) target = $region17
    $region16: #{tpu_custom_call.1} parent=1 // pred_region
      %37 = dma.done [#allocation3], 128
    $region17: #{tpu_custom_call.1} parent=1 // pred_fallthru
      _
    // Predicated region
    $region18: #{tpu_custom_call.1} parent=1 // pred_check
      _
    $region19: #{tpu_custom_call.1} parent=1 // pred_check_branch
      %39 = sbr.rel (0) target = $region21
    $region20: #{tpu_custom_call.1} parent=1 // pred_region
      %40 = dma.done [#allocation6], 640
    $region21: #{tpu_custom_call.1} parent=1 // pred_fallthru
      _
    %v41 = vld [vmem:[#allocation2] sm:$0xff]
    %v42 = vld [vmem:[#allocation5] sm:$0xff]
    %v43 = vld [vmem:[#allocation5 + $0x8] sm:$0xff]
    %v44 = vld [vmem:[#allocation5 + $0x10] sm:$0xff]
    %v45 = vld [vmem:[#allocation5 + $0x18] sm:$0xff]
    %v46 = vld [vmem:[#allocation5 + $0x20] sm:$0xff]
    %v47 = vld [vmem:[%s2] sm:$0x1]
    %v49 = vlaneseq
    %v50 = vshrl.u32 %v49, 7
    %v51 = vsub.s32 0, %v50
    %v52 = vrot.slane %v47, %v51
    %vm54 = vcmask 326656
    %v56 = vsel %vm54, %v41, 0
    %58 = vmatprep.subr.mxu0 0.0
    %59 = vmatpush1.msra.mxu0 0.0
    %60 = vmatprep.subr.mxu0 0.0
    %61 = vmatpush1.msra.mxu0 0.0
    %62 = vmatprep.subr.mxu0 0.0
    %63 = vmatpush1.msra.mxu0 0.0
    %64 = vmatprep.subr.mxu0 0.0
    %65 = vmatpush1.msra.mxu0 0.0
    %66 = vmatprep.subr.mxu0 0.0
    %67 = vmatpush1.msra.mxu0 0.0
    %68 = vmatprep.subr.mxu0 0.0
    %69 = vmatpush1.msra.mxu0 0.0
    %70 = vmatprep.subr.mxu0 0.0
    %71 = vmatpush1.msra.mxu0 0.0
    %72 = vmatprep.subr.mxu0 0.0
    %73 = vmatpush1.msra.mxu0 0.0
    %74 = vmatprep.subr.mxu0 0.0
    %75 = vmatpush1.msra.mxu0 0.0
    %76 = vmatprep.subr.mxu0 0.0
    %77 = vmatpush1.msra.mxu0 0.0
    %78 = vmatprep.subr.mxu0 0.0
    %79 = vmatpush1.msra.mxu0 0.0
    %80 = vmatprep.subr.mxu0 0.0
    %81 = vmatpush1.msra.mxu0 %v46
    %82 = vmatprep.subr.mxu0 0.0
    %83 = vmatpush1.msra.mxu0 %v45
    %84 = vmatprep.subr.mxu0 0.0
    %85 = vmatpush1.msra.mxu0 %v44
    %86 = vmatprep.subr.mxu0 0.0
    %87 = vmatpush1.msra.mxu0 %v43
    %88 = vmatprep.subr.mxu0 0.0
    %89 = vmatpush1.msra.mxu0 %v42
    %90 = vmatprep.subr.mxu0 0.0
    %91 = vmatpush2.msra.mxu0 0.0
    %92 = vmatprep.subr.mxu0 0.0
    %93 = vmatpush2.msra.mxu0 0.0
    %94 = vmatprep.subr.mxu0 0.0
    %95 = vmatpush2.msra.mxu0 0.0
    %96 = vmatprep.subr.mxu0 0.0
    %97 = vmatpush2.msra.mxu0 0.0
    %98 = vmatprep.subr.mxu0 0.0
    %99 = vmatpush2.msra.mxu0 0.0
    %100 = vmatprep.subr.mxu0 0.0
    %101 = vmatpush2.msra.mxu0 0.0
    %102 = vmatprep.subr.mxu0 0.0
    %103 = vmatpush2.msra.mxu0 0.0
    %104 = vmatprep.subr.mxu0 0.0
    %105 = vmatpush2.msra.mxu0 0.0
    %106 = vmatprep.subr.mxu0 0.0
    %107 = vmatpush2.msra.mxu0 0.0
    %108 = vmatprep.subr.mxu0 0.0
    %109 = vmatpush2.msra.mxu0 0.0
    %110 = vmatprep.subr.mxu0 0.0
    %111 = vmatpush2.msra.mxu0 0.0
    %112 = vmatprep.subr.mxu0 0.0
    %113 = vmatpush2.msra.mxu0 0.0
    %114 = vmatprep.subr.mxu0 0.0
    %115 = vmatpush2.msra.mxu0 0.0
    %116 = vmatprep.subr.mxu0 0.0
    %117 = vmatpush2.msra.mxu0 0.0
    %118 = vmatprep.subr.mxu0 0.0
    %119 = vmatpush2.msra.mxu0 0.0
    %120 = vmatprep.subr.mxu0 0.0
    %121 = vmatpush2.msra.mxu0 0.0
    %122 = vmatprep.mubr.f32.mxu0 0.0
    %123 = vmatmul.mubr.f32.gmra.mxu0 %v56
    %v124 = vpop.f32.mrf.mxu0
    %v125 = vadd.f32 %v52, %v124
    %v126 = vpop.f32.mrf.mxu0
    %127 = vdwg.mxu0
    %128 = vst [vmem:[#allocation7] sm:$0xff] %v125
    // Predicated region
    $region22: #{tpu_custom_call.1} parent=1 // pred_check
      _
    $region23: #{tpu_custom_call.1} parent=1 // pred_check_branch
      %130 = sbr.rel (0) target = $region25
    $region24: #{tpu_custom_call.1} parent=1 // pred_region
      %s132 = ssub.s32 128, 128
      %133 = vsyncadd [#allocation4], %s132
      %s135 = sshll.u32 [#allocation7], 4
      %s136 = int_to_ptr.vmem [resolvable:$true] %s135
      %138 = dma.vmem_to_hbm [thread:$0]  %s136, 128, %s3, [#allocation4]
    $region25: #{tpu_custom_call.1} parent=1 // pred_fallthru
      _
    // Predicated region
    $region26: #{tpu_custom_call.1} parent=1 // pred_check
      _
    $region27: #{tpu_custom_call.1} parent=1 // pred_check_branch
      %140 = sbr.rel (0) target = $region29
    $region28: #{tpu_custom_call.1} parent=1 // pred_region
      %141 = dma.done [#allocation4], 128
    $region29: #{tpu_custom_call.1} parent=1 // pred_fallthru
      _
    %142 = vsyncpa [#allocation3], 1
    %143 = vsyncpa [#allocation6], 1
    %144 = vsyncpa [#allocation4], 1

</llo_original>
